<compile_context>
chip_gen: v5e
topology: v5e:2x2
jax: 0.10.0
libtpu: 0.0.40
codegen_flags: <defaults>
</compile_context>

<pallas_src>
import jax
import jax.numpy as jnp
from jax.experimental import pallas as pl
from jax.experimental.pallas import tpu as pltpu


def _make_opl_kernel(gamma, tb, b, d):
    """tb: row-tile size of the Gram matrix, b: batch size, d: feature dim."""

    def kernel(feat_ref, lab_col_ref, lab_row_ref,          # inputs (resident)
               loss_ref,                                    # output (1, 1)
               rn_col, rn_row, pos_s, pos_c, neg_s, neg_c):  # scratch
        step = pl.program_id(0)

        # ---- step 0: reciprocal norms (both layouts) + zero the accumulators -
        @pl.when(step == 0)
        def _init():
            x = feat_ref[...]                                       # (B, D) f32
            xx = x * x
            # column layout: (B, 1) via lane reduction
            ssq_col = jnp.sum(xx, axis=-1, keepdims=True)           # (B, 1)
            # lane layout: (1, B) via ones(1,D) @ xx^T  (no transpose needed)
            ones_row = jnp.ones((1, d), jnp.float32)
            ssq_row = jax.lax.dot_general(
                ones_row, xx, (((1,), (1,)), ((), ())),
                preferred_element_type=jnp.float32)                 # (1, B)
            # F.normalize: x / max(||x||, eps)
            rn_col[...] = 1.0 / jnp.maximum(jnp.sqrt(ssq_col), 1e-12)
            rn_row[...] = 1.0 / jnp.maximum(jnp.sqrt(ssq_row), 1e-12)

            zero = jnp.zeros((1, 1), jnp.float32)
            pos_s[...] = zero
            pos_c[...] = zero
            neg_s[...] = zero
            neg_c[...] = zero

        # ---- Gram row-tile: (TB, B) = x_tile @ x_all^T (contract over D) -----
        start = pl.multiple_of(step * tb, tb)
        xi = feat_ref[pl.ds(start, tb), :]                          # (TB, D)
        xa = feat_ref[...]                                          # (B,  D)
        raw = jax.lax.dot_general(
            xi, xa, (((1,), (1,)), ((), ())),
            preferred_element_type=jnp.float32)                     # (TB, B)
        # rescale to the normalized-feature Gram tile: dot[i,j] = raw * rn_i * rn_j
        dot = raw * rn_col[pl.ds(start, tb), :] * rn_row[...]       # (TB, B)

        # ---- masks for this tile --------------------------------------------
        lab_i = lab_col_ref[pl.ds(start, tb), :]                    # (TB, 1) int32
        lab_a = lab_row_ref[...]                                    # (1,  B) int32
        same = lab_i == lab_a                                       # (TB, B) bool

        row = jax.lax.broadcasted_iota(jnp.int32, (tb, b), 0) + step * tb
        col = jax.lax.broadcasted_iota(jnp.int32, (tb, b), 1)
        not_diag = row != col

        # ---- partial reductions into (1,1) accumulators ----------------------
        zeros = jnp.zeros_like(dot)
        pos_s[...] += jnp.sum(jnp.where(same & not_diag, dot, zeros), keepdims=True)
        neg_s[...] += jnp.sum(jnp.where(same, zeros, dot), keepdims=True)

        # counts are pure label statistics: diag entries are always same-label
        cnt_same = jnp.sum(jnp.where(same, 1.0, 0.0), keepdims=True)  # (1, 1)
        pos_c[...] += cnt_same - float(tb)
        neg_c[...] += float(tb * b) - cnt_same

        # ---- finalize on the last step ---------------------------------------
        @pl.when(step == pl.num_programs(0) - 1)
        def _finalize():
            pos_mean = pos_s[...] / (pos_c[...] + 1e-6)
            neg_mean = neg_s[...] / (neg_c[...] + 1e-6)
            loss_ref[...] = (1.0 - pos_mean + gamma * neg_mean).astype(loss_ref.dtype)

    return kernel


def _pick_row_block(b):
    """Largest tile dividing B, sublane-aligned, keeping the (TB, B) Gram tile modest."""
    for cand in (512, 256, 128, 64, 32, 16, 8):
        if b % cand == 0 and cand * b * 4 <= (4 << 20):
            return cand
    return b  # full-extent fallback (single grid step)


def orthogonal_projection_loss(features, labels, *, gamma=0.5, row_block=None):
    """features: (B, D) float, labels: (B,) int.  Returns scalar loss (float32)."""
    B, D = features.shape
    if row_block is None:
        row_block = _pick_row_block(B)
    assert B % row_block == 0, (B, row_block)
    num_steps = B // row_block

    features = features.astype(jnp.float32)
    lab_col = labels.reshape(B, 1).astype(jnp.int32)   # labels on sublanes
    lab_row = labels.reshape(1, B).astype(jnp.int32)   # labels on lanes

    out = pl.pallas_call(
        _make_opl_kernel(gamma, row_block, B, D),
        out_shape=jax.ShapeDtypeStruct((1, 1), jnp.float32),
        grid=(num_steps,),
        in_specs=[
            # All inputs resident across the (reduction) grid axis.
            pl.BlockSpec((B, D), lambda i: (0, 0)),
            pl.BlockSpec((B, 1), lambda i: (0, 0)),
            pl.BlockSpec((1, B), lambda i: (0, 0)),
        ],
        out_specs=pl.BlockSpec((1, 1), lambda i: (0, 0)),
        scratch_shapes=[
            pltpu.VMEM((B, 1), jnp.float32),   # reciprocal norms, column layout
            pltpu.VMEM((1, B), jnp.float32),   # reciprocal norms, lane layout
            pltpu.VMEM((1, 1), jnp.float32),   # pos sum
            pltpu.VMEM((1, 1), jnp.float32),   # pos count
            pltpu.VMEM((1, 1), jnp.float32),   # neg sum
            pltpu.VMEM((1, 1), jnp.float32),   # neg count
        ],
        compiler_params=pltpu.CompilerParams(
            dimension_semantics=("arbitrary",)),  # accumulator axis -> sequential
    )(features, lab_col, lab_row)

    return out[0, 0]


def reference_opl(features, labels, gamma=0.5):
    """Pure-JAX reference matching the PyTorch OrthogonalProjectionLoss.forward."""
    nrm = jnp.sqrt(jnp.sum(features * features, axis=1, keepdims=True))
    f = features / jnp.maximum(nrm, 1e-12)
    mask = labels[:, None] == labels[None, :]
    eye = jnp.eye(mask.shape[0], dtype=bool)
    mask_pos = jnp.where(mask & ~eye, 1.0, 0.0)
    mask_neg = jnp.where(~mask, 1.0, 0.0)
    dot = f @ f.T
    pos_mean = jnp.sum(mask_pos * dot) / (jnp.sum(mask_pos) + 1e-6)
    neg_mean = jnp.sum(mask_neg * dot) / (jnp.sum(mask_neg) + 1e-6)
    return 1.0 - pos_mean + gamma * neg_mean


if __name__ == "__main__":
    B, D, n_classes = 128, 128, 8
    gamma = 0.5

    key = jax.random.PRNGKey(0)
    kf, kl = jax.random.split(key)
    features = jax.random.normal(kf, (B, D), dtype=jnp.float32)
    labels = jax.random.randint(kl, (B,), 0, n_classes, dtype=jnp.int32)

    # row_block=64 -> 2 grid steps, exercising the cross-step accumulation path.
    loss = orthogonal_projection_loss(features, labels, gamma=gamma, row_block=64)
    loss = jax.block_until_ready(loss)

    ref = reference_opl(features, labels, gamma=gamma)
    err = float(jnp.abs(loss - ref))
    assert err < 2e-3, f"abs error {err} (kernel={float(loss)}, ref={float(ref)})"
    print("KERNEL_OK")
</pallas_src>

<mosaic_0001>
module attributes {stable_mosaic.version = 11 : i64} {
  func.func @kernel(%arg0: i32, %arg1: memref<128x128xf32, #tpu.memory_space<vmem>>, %arg2: memref<128x1xi32, #tpu.memory_space<vmem>>, %arg3: memref<1x128xi32, #tpu.memory_space<vmem>>, %arg4: memref<1x1xf32, #tpu.memory_space<vmem>>, %arg5: memref<128x1xf32, #tpu.memory_space<vmem>>, %arg6: memref<1x128xf32, #tpu.memory_space<vmem>>, %arg7: memref<1x1xf32, #tpu.memory_space<vmem>>, %arg8: memref<1x1xf32, #tpu.memory_space<vmem>>, %arg9: memref<1x1xf32, #tpu.memory_space<vmem>>, %arg10: memref<1x1xf32, #tpu.memory_space<vmem>>) attributes {dimension_semantics = [#tpu.dimension_semantics<arbitrary>], iteration_bounds = array<i64: 2>, scalar_prefetch = 0 : i64, scratch_operands = 6 : i64, tpu.core_type = #tpu.core_type<tc>, window_params = [{pipeline_mode = #tpu.pipeline_mode<synchronous>, transform_indices = @transform_0, window_bounds = array<i64: 128, 128>}, {pipeline_mode = #tpu.pipeline_mode<synchronous>, transform_indices = @transform_1, window_bounds = array<i64: 128, 1>}, {pipeline_mode = #tpu.pipeline_mode<synchronous>, transform_indices = @transform_2, window_bounds = array<i64: 1, 128>}, {pipeline_mode = #tpu.pipeline_mode<synchronous>, transform_indices = @transform_3, window_bounds = array<i64: 1, 1>}]} {
    %c0_i32 = arith.constant 0 : i32
    %0 = arith.cmpi eq, %arg0, %c0_i32 : i32
    %1 = arith.extui %0 : i1 to i32
    %c0_i32_0 = arith.constant 0 : i32
    %2 = arith.cmpi ne, %1, %c0_i32_0 : i32
    scf.if %2 {
      %c0_35 = arith.constant 0 : index
      %c0_36 = arith.constant 0 : index
      %69 = vector.load %arg1[%c0_35, %c0_36] : memref<128x128xf32, #tpu.memory_space<vmem>>, vector<128x128xf32>
      %70 = arith.mulf %69, %69 : vector<128x128xf32>
      %cst_37 = arith.constant dense<0.000000e+00> : vector<128xf32>
      %71 = vector.multi_reduction <add>, %70, %cst_37 [1] : vector<128x128xf32> to vector<128xf32>
      %72 = vector.shape_cast %71 : vector<128xf32> to vector<128x1xf32>
      %cst_38 = arith.constant 1.000000e+00 : f32
      %73 = vector.broadcast %cst_38 : f32 to vector<1x128xf32>
      %cst_39 = arith.constant dense<0.000000e+00> : vector<1x128xf32>
      %74 = tpu.matmul %73, %70, %cst_39 {dimension_numbers = #tpu.dot_dimension_numbers<[1], [1], [0], [0], [0, 0, 1, 0], [], []>} : vector<1x128xf32>, vector<128x128xf32>, vector<1x128xf32> -> vector<1x128xf32>
      %75 = math.sqrt %72 : vector<128x1xf32>
      %cst_40 = arith.constant 9.99999996E-13 : f32
      %76 = vector.broadcast %cst_40 : f32 to vector<128x1xf32>
      %77 = arith.maximumf %75, %76 : vector<128x1xf32>
      %cst_41 = arith.constant 1.000000e+00 : f32
      %78 = vector.broadcast %cst_41 : f32 to vector<128x1xf32>
      %79 = arith.divf %78, %77 : vector<128x1xf32>
      %c0_42 = arith.constant 0 : index
      %c0_43 = arith.constant 0 : index
      %80 = vector.load %arg5[%c0_42, %c0_43] : memref<128x1xf32, #tpu.memory_space<vmem>>, vector<128x1xf32>
      tpu.vector_store %arg5[%c0_42, %c0_43], %79 {strides = array<i32>} : memref<128x1xf32, #tpu.memory_space<vmem>>, vector<128x1xf32>,
      %81 = math.sqrt %74 : vector<1x128xf32>
      %cst_44 = arith.constant 9.99999996E-13 : f32
      %82 = vector.broadcast %cst_44 : f32 to vector<1x128xf32>
      %83 = arith.maximumf %81, %82 : vector<1x128xf32>
      %cst_45 = arith.constant 1.000000e+00 : f32
      %84 = vector.broadcast %cst_45 : f32 to vector<1x128xf32>
      %85 = arith.divf %84, %83 : vector<1x128xf32>
      %c0_46 = arith.constant 0 : index
      %c0_47 = arith.constant 0 : index
      %86 = vector.load %arg6[%c0_46, %c0_47] : memref<1x128xf32, #tpu.memory_space<vmem>>, vector<1x128xf32>
      tpu.vector_store %arg6[%c0_46, %c0_47], %85 {strides = array<i32>} : memref<1x128xf32, #tpu.memory_space<vmem>>, vector<1x128xf32>,
      %cst_48 = arith.constant 0.000000e+00 : f32
      %87 = vector.broadcast %cst_48 : f32 to vector<1x1xf32>
      %c0_49 = arith.constant 0 : index
      %c0_50 = arith.constant 0 : index
      %88 = vector.load %arg7[%c0_49, %c0_50] : memref<1x1xf32, #tpu.memory_space<vmem>>, vector<1x1xf32>
      tpu.vector_store %arg7[%c0_49, %c0_50], %87 {strides = array<i32>} : memref<1x1xf32, #tpu.memory_space<vmem>>, vector<1x1xf32>,
      %c0_51 = arith.constant 0 : index
      %c0_52 = arith.constant 0 : index
      %89 = vector.load %arg8[%c0_51, %c0_52] : memref<1x1xf32, #tpu.memory_space<vmem>>, vector<1x1xf32>
      tpu.vector_store %arg8[%c0_51, %c0_52], %87 {strides = array<i32>} : memref<1x1xf32, #tpu.memory_space<vmem>>, vector<1x1xf32>,
      %c0_53 = arith.constant 0 : index
      %c0_54 = arith.constant 0 : index
      %90 = vector.load %arg9[%c0_53, %c0_54] : memref<1x1xf32, #tpu.memory_space<vmem>>, vector<1x1xf32>
      tpu.vector_store %arg9[%c0_53, %c0_54], %87 {strides = array<i32>} : memref<1x1xf32, #tpu.memory_space<vmem>>, vector<1x1xf32>,
      %c0_55 = arith.constant 0 : index
      %c0_56 = arith.constant 0 : index
      %91 = vector.load %arg10[%c0_55, %c0_56] : memref<1x1xf32, #tpu.memory_space<vmem>>, vector<1x1xf32>
      tpu.vector_store %arg10[%c0_55, %c0_56], %87 {strides = array<i32>} : memref<1x1xf32, #tpu.memory_space<vmem>>, vector<1x1xf32>,
    } else {
    }
    %c64_i32 = arith.constant 64 : i32
    %3 = arith.muli %arg0, %c64_i32 : i32
    %4 = tpu.assume_multiple %3, 64 : i32
    %5 = arith.index_cast %4 : i32 to index
    %c0 = arith.constant 0 : index
    %6 = vector.load %arg1[%5, %c0] : memref<128x128xf32, #tpu.memory_space<vmem>>, vector<64x128xf32>
    %c0_1 = arith.constant 0 : index
    %c0_2 = arith.constant 0 : index
    %7 = vector.load %arg1[%c0_1, %c0_2] : memref<128x128xf32, #tpu.memory_space<vmem>>, vector<128x128xf32>
    %cst = arith.constant dense<0.000000e+00> : vector<64x128xf32>
    %8 = tpu.matmul %6, %7, %cst {dimension_numbers = #tpu.dot_dimension_numbers<[1], [1], [0], [0], [0, 0, 1, 0], [], []>} : vector<64x128xf32>, vector<128x128xf32>, vector<64x128xf32> -> vector<64x128xf32>
    %9 = arith.index_cast %4 : i32 to index
    %c0_3 = arith.constant 0 : index
    %10 = vector.load %arg5[%9, %c0_3] : memref<128x1xf32, #tpu.memory_space<vmem>>, vector<64x1xf32>
    %11 = vector.broadcast %10 : vector<64x1xf32> to vector<64x128xf32>
    %12 = arith.mulf %8, %11 : vector<64x128xf32>
    %c0_4 = arith.constant 0 : index
    %c0_5 = arith.constant 0 : index
    %13 = vector.load %arg6[%c0_4, %c0_5] : memref<1x128xf32, #tpu.memory_space<vmem>>, vector<1x128xf32>
    %14 = vector.broadcast %13 : vector<1x128xf32> to vector<64x128xf32>
    %15 = arith.mulf %12, %14 : vector<64x128xf32>
    %16 = arith.index_cast %4 : i32 to index
    %c0_6 = arith.constant 0 : index
    %17 = vector.load %arg2[%16, %c0_6] : memref<128x1xi32, #tpu.memory_space<vmem>>, vector<64x1xi32>
    %c0_7 = arith.constant 0 : index
    %c0_8 = arith.constant 0 : index
    %18 = vector.load %arg3[%c0_7, %c0_8] : memref<1x128xi32, #tpu.memory_space<vmem>>, vector<1x128xi32>
    %19 = vector.broadcast %17 : vector<64x1xi32> to vector<64x128xi32>
    %20 = vector.broadcast %18 : vector<1x128xi32> to vector<64x128xi32>
    %21 = arith.cmpi eq, %19, %20 : vector<64x128xi32>
    %22 = tpu.iota {dimensions = array<i32: 0>} : vector<64x128xi32>
    %c64_i32_9 = arith.constant 64 : i32
    %23 = arith.muli %arg0, %c64_i32_9 : i32
    %24 = vector.broadcast %23 : i32 to vector<64x128xi32>
    %25 = arith.addi %22, %24 : vector<64x128xi32>
    %26 = tpu.iota {dimensions = array<i32: 1>} : vector<64x128xi32>
    %27 = arith.cmpi ne, %25, %26 : vector<64x128xi32>
    %cst_10 = arith.constant 0.000000e+00 : f32
    %28 = vector.broadcast %cst_10 : f32 to vector<64x128xf32>
    %c0_11 = arith.constant 0 : index
    %c0_12 = arith.constant 0 : index
    %29 = vector.load %arg7[%c0_11, %c0_12] : memref<1x1xf32, #tpu.memory_space<vmem>>, vector<1x1xf32>
    %30 = arith.andi %21, %27 : vector<64x128xi1>
    %31 = arith.select %30, %15, %28 : vector<64x128xi1>, vector<64x128xf32>
    %32 = vector.shape_cast %31 : vector<64x128xf32> to vector<1x64x128xf32>
    %cst_13 = arith.constant dense<0.000000e+00> : vector<1xf32>
    %33 = vector.multi_reduction <add>, %32, %cst_13 [1, 2] : vector<1x64x128xf32> to vector<1xf32>
    %34 = vector.shape_cast %33 : vector<1xf32> to vector<1x1x1xf32>
    %35 = vector.extract %34[0, 0, 0] : f32 from vector<1x1x1xf32>
    %36 = vector.broadcast %35 : f32 to vector<1x1xf32>
    %37 = arith.addf %29, %36 : vector<1x1xf32>
    %c0_14 = arith.constant 0 : index
    %c0_15 = arith.constant 0 : index
    %38 = vector.load %arg7[%c0_14, %c0_15] : memref<1x1xf32, #tpu.memory_space<vmem>>, vector<1x1xf32>
    tpu.vector_store %arg7[%c0_14, %c0_15], %37 {strides = array<i32>} : memref<1x1xf32, #tpu.memory_space<vmem>>, vector<1x1xf32>,
    %c0_16 = arith.constant 0 : index
    %c0_17 = arith.constant 0 : index
    %39 = vector.load %arg9[%c0_16, %c0_17] : memref<1x1xf32, #tpu.memory_space<vmem>>, vector<1x1xf32>
    %40 = arith.select %21, %28, %15 : vector<64x128xi1>, vector<64x128xf32>
    %41 = vector.shape_cast %40 : vector<64x128xf32> to vector<1x64x128xf32>
    %cst_18 = arith.constant dense<0.000000e+00> : vector<1xf32>
    %42 = vector.multi_reduction <add>, %41, %cst_18 [1, 2] : vector<1x64x128xf32> to vector<1xf32>
    %43 = vector.shape_cast %42 : vector<1xf32> to vector<1x1x1xf32>
    %44 = vector.extract %43[0, 0, 0] : f32 from vector<1x1x1xf32>
    %45 = vector.broadcast %44 : f32 to vector<1x1xf32>
    %46 = arith.addf %39, %45 : vector<1x1xf32>
    %c0_19 = arith.constant 0 : index
    %c0_20 = arith.constant 0 : index
    %47 = vector.load %arg9[%c0_19, %c0_20] : memref<1x1xf32, #tpu.memory_space<vmem>>, vector<1x1xf32>
    tpu.vector_store %arg9[%c0_19, %c0_20], %46 {strides = array<i32>} : memref<1x1xf32, #tpu.memory_space<vmem>>, vector<1x1xf32>,
    %cst_21 = arith.constant 1.000000e+00 : f32
    %cst_22 = arith.constant 0.000000e+00 : f32
    %48 = vector.broadcast %cst_21 : f32 to vector<64x128xf32>
    %49 = vector.broadcast %cst_22 : f32 to vector<64x128xf32>
    %50 = arith.select %21, %48, %49 : vector<64x128xi1>, vector<64x128xf32>
    %51 = vector.shape_cast %50 : vector<64x128xf32> to vector<1x64x128xf32>
    %cst_23 = arith.constant dense<0.000000e+00> : vector<1xf32>
    %52 = vector.multi_reduction <add>, %51, %cst_23 [1, 2] : vector<1x64x128xf32> to vector<1xf32>
    %53 = vector.shape_cast %52 : vector<1xf32> to vector<1x1x1xf32>
    %54 = vector.extract %53[0, 0, 0] : f32 from vector<1x1x1xf32>
    %55 = vector.broadcast %54 : f32 to vector<1x1xf32>
    %c0_24 = arith.constant 0 : index
    %c0_25 = arith.constant 0 : index
    %56 = vector.load %arg8[%c0_24, %c0_25] : memref<1x1xf32, #tpu.memory_space<vmem>>, vector<1x1xf32>
    %cst_26 = arith.constant 6.400000e+01 : f32
    %57 = vector.broadcast %cst_26 : f32 to vector<1x1xf32>
    %58 = arith.subf %55, %57 : vector<1x1xf32>
    %59 = arith.addf %56, %58 : vector<1x1xf32>
    %c0_27 = arith.constant 0 : index
    %c0_28 = arith.constant 0 : index
    %60 = vector.load %arg8[%c0_27, %c0_28] : memref<1x1xf32, #tpu.memory_space<vmem>>, vector<1x1xf32>
    tpu.vector_store %arg8[%c0_27, %c0_28], %59 {strides = array<i32>} : memref<1x1xf32, #tpu.memory_space<vmem>>, vector<1x1xf32>,
    %c0_29 = arith.constant 0 : index
    %c0_30 = arith.constant 0 : index
    %61 = vector.load %arg10[%c0_29, %c0_30] : memref<1x1xf32, #tpu.memory_space<vmem>>, vector<1x1xf32>
    %cst_31 = arith.constant 8.192000e+03 : f32
    %62 = vector.broadcast %cst_31 : f32 to vector<1x1xf32>
    %63 = arith.subf %62, %55 : vector<1x1xf32>
    %64 = arith.addf %61, %63 : vector<1x1xf32>
    %c0_32 = arith.constant 0 : index
    %c0_33 = arith.constant 0 : index
    %65 = vector.load %arg10[%c0_32, %c0_33] : memref<1x1xf32, #tpu.memory_space<vmem>>, vector<1x1xf32>
    tpu.vector_store %arg10[%c0_32, %c0_33], %64 {strides = array<i32>} : memref<1x1xf32, #tpu.memory_space<vmem>>, vector<1x1xf32>,
    %c1_i32 = arith.constant 1 : i32
    %66 = arith.cmpi eq, %arg0, %c1_i32 : i32
    %67 = arith.extui %66 : i1 to i32
    %c0_i32_34 = arith.constant 0 : i32
    %68 = arith.cmpi ne, %67, %c0_i32_34 : i32
    scf.if %68 {
      %c0_35 = arith.constant 0 : index
      %c0_36 = arith.constant 0 : index
      %69 = vector.load %arg7[%c0_35, %c0_36] : memref<1x1xf32, #tpu.memory_space<vmem>>, vector<1x1xf32>
      %c0_37 = arith.constant 0 : index
      %c0_38 = arith.constant 0 : index
      %70 = vector.load %arg8[%c0_37, %c0_38] : memref<1x1xf32, #tpu.memory_space<vmem>>, vector<1x1xf32>
      %cst_39 = arith.constant 9.99999997E-7 : f32
      %71 = vector.broadcast %cst_39 : f32 to vector<1x1xf32>
      %72 = arith.addf %70, %71 : vector<1x1xf32>
      %73 = arith.divf %69, %72 : vector<1x1xf32>
      %c0_40 = arith.constant 0 : index
      %c0_41 = arith.constant 0 : index
      %74 = vector.load %arg9[%c0_40, %c0_41] : memref<1x1xf32, #tpu.memory_space<vmem>>, vector<1x1xf32>
      %c0_42 = arith.constant 0 : index
      %c0_43 = arith.constant 0 : index
      %75 = vector.load %arg10[%c0_42, %c0_43] : memref<1x1xf32, #tpu.memory_space<vmem>>, vector<1x1xf32>
      %cst_44 = arith.constant 9.99999997E-7 : f32
      %76 = vector.broadcast %cst_44 : f32 to vector<1x1xf32>
      %77 = arith.addf %75, %76 : vector<1x1xf32>
      %78 = arith.divf %74, %77 : vector<1x1xf32>
      %cst_45 = arith.constant 1.000000e+00 : f32
      %79 = vector.broadcast %cst_45 : f32 to vector<1x1xf32>
      %80 = arith.subf %79, %73 : vector<1x1xf32>
      %cst_46 = arith.constant 5.000000e-01 : f32
      %81 = vector.broadcast %cst_46 : f32 to vector<1x1xf32>
      %82 = arith.mulf %81, %78 : vector<1x1xf32>
      %83 = arith.addf %80, %82 : vector<1x1xf32>
      %c0_47 = arith.constant 0 : index
      %c0_48 = arith.constant 0 : index
      %84 = vector.load %arg4[%c0_47, %c0_48] : memref<1x1xf32, #tpu.memory_space<vmem>>, vector<1x1xf32>
      tpu.vector_store %arg4[%c0_47, %c0_48], %83 {strides = array<i32>} : memref<1x1xf32, #tpu.memory_space<vmem>>, vector<1x1xf32>,
    } else {
    }
    return
  }
  func.func @transform_0(%arg0: i32) -> (i32, i32) {
    %c0_i32 = arith.constant 0 : i32
    %c0_i32_0 = arith.constant 0 : i32
    %c0_i32_1 = arith.constant 0 : i32
    return %c0_i32, %c0_i32_0 : i32, i32
  }
  func.func @transform_1(%arg0: i32) -> (i32, i32) {
    %c0_i32 = arith.constant 0 : i32
    %c0_i32_0 = arith.constant 0 : i32
    %c0_i32_1 = arith.constant 0 : i32
    return %c0_i32, %c0_i32_0 : i32, i32
  }
  func.func @transform_2(%arg0: i32) -> (i32, i32) {
    %c0_i32 = arith.constant 0 : i32
    %c0_i32_0 = arith.constant 0 : i32
    %c0_i32_1 = arith.constant 0 : i32
    return %c0_i32, %c0_i32_0 : i32, i32
  }
  func.func @transform_3(%arg0: i32) -> (i32, i32) {
    %c0_i32 = arith.constant 0 : i32
    %c0_i32_0 = arith.constant 0 : i32
    %c0_i32_1 = arith.constant 0 : i32
    return %c0_i32, %c0_i32_0 : i32, i32
  }
}

</mosaic_0001>

<llo_original>
// kernel: tpu_custom_call.1
$region0: #{tpu_custom_call.1}
  #allocation0 [shape = 'u32[]', space=smem, size = 0x4, offset = 0x4, fixed_abs, tag = 'smem constant byte address 0x4 - core index']
  #allocation1 [shape = 'u32[72,128]{1,0:T(1,128)}', space=vmem, size = 0x9000, scoped, tag = 'internal scratch']
  #allocation2 [shape = 'f32[128,1]{1,0:T(8,128)}', space=vmem, size = 0x10000, scoped, tag = 'scratch operand']
  #allocation3 [shape = 'f32[1,128]{1,0:T(1,128)}', space=vmem, size = 0x200, scoped, tag = 'scratch operand']
  #allocation4 [shape = 'f32[1,1]{1,0:T(1,128)}', space=vmem, size = 0x200, scoped, tag = 'scratch operand']
  #allocation5 [shape = 'f32[1,1]{1,0:T(1,128)}', space=vmem, size = 0x200, scoped, tag = 'scratch operand']
  #allocation6 [shape = 'f32[1,1]{1,0:T(1,128)}', space=vmem, size = 0x200, scoped, tag = 'scratch operand']
  #allocation7 [shape = 'f32[1,1]{1,0:T(1,128)}', space=vmem, size = 0x200, scoped, tag = 'scratch operand']
  %s0 = inlined_call_operand.vmem [shape: f32[128,128], index: 0, kind: input, shape index: {}]
  %s1 = inlined_call_operand.vmem [shape: s32[128,1], index: 1, kind: input, shape index: {}]
  %s2 = inlined_call_operand.vmem [shape: s32[1,128], index: 2, kind: input, shape index: {}]
  %s3 = inlined_call_operand.hbm [shape: f32[1,1], index: 3, kind: output, shape index: {}]
  %s4 = sld [smem:[#allocation0]]
  $region53: #{tpu_custom_call.1} parent=0
    _
  %s6 = ssub.s32 1, %s4
  %s7 = scalar_select 0, %s6, %s4
  $region1: #{tpu_custom_call.1} parent=0
    #allocation8 [shape = 'u8[512]{0}', space=vmem, size = 0x400, scoped, tag = 'output window, operand 0, single buffered']
    #allocation9 [shape = 's32[2]{0}', space=sflag, size = 0x8, scoped, tag = 'scoped memory for tpu_custom_call.1']
    %8 = vsyncpa [#allocation9], 0
    loop: start=0, step=1, limit=4
    $region2: #{tpu_custom_call.1} parent=1 // loop_pre_header
      _
    $region3: #{tpu_custom_call.1} parent=1 // loop_header
      %s10 = sphi 0, %s14
      %p11 = scmp.ge.s32.totalorder %s10, 4
      %s18 = sphi 0, %s18
      %s20 = sphi 0, %s18
      %s21 = sphi 0, %s20
      %s35 = sphi 0, %s21
      %s39 = sphi 0, %s39
      %s41 = sphi 0, %s39
      %s42 = sphi 0, %s41
      %s56 = sphi 0, %s42
      %s60 = sphi 0, %s60
      %s62 = sphi 0, %s60
      %s63 = sphi 0, %s62
      %s77 = sphi 0, %s63
      %s81 = sphi 0, %s81
      %s83 = sphi 0, %s81
      %s84 = sphi 0, %s83
      %s98 = sphi 0, %s84
    $region4: #{tpu_custom_call.1} parent=1 // loop_header_branch
      %13 = sbr.rel (%p11) target = $region8
    $region5: #{tpu_custom_call.1} parent=1 // loop_body
      %s15 = ssub.s32 %s10, 1
      %s16 = ssub.s32 %s10, 2
      %s17 = sadd.s32 %s10, 1
      %s19 = sadd.s32 %s18, 1
      %p22 = scmp.eq.s32.totalorder %s10, 1
      %p23 = scmp.ne.s32.totalorder %s18, %s20
      %p24 = scmp.eq.s32.totalorder %s10, 0
      %p25 = por %p23, %p24
      %p26 = scmp.ne.s32.totalorder %s18, %s20
      %p27 = scmp.eq.s32.totalorder %s15, 1
      %p28 = por %p26, %p27
      %p29 = scmp.ne.s32.totalorder %s20, %s21
      %p30 = scmp.eq.s32.totalorder %s15, 0
      %p31 = por %p29, %p30
      %p32 = scmp.ne.s32.totalorder %s20, %s21
      %p33 = scmp.eq.s32.totalorder %s16, 1
      %p34 = por %p32, %p33
      %p36 = scmp.ne.s32.totalorder %s21, %s35
      %p37 = scmp.eq.s32.totalorder %s16, 0
      %p38 = por %p36, %p37
      %s40 = sadd.s32 %s39, 1
      %p43 = scmp.eq.s32.totalorder %s10, 1
      %p44 = scmp.ne.s32.totalorder %s39, %s41
      %p45 = scmp.eq.s32.totalorder %s10, 0
      %p46 = por %p44, %p45
      %p47 = scmp.ne.s32.totalorder %s39, %s41
      %p48 = scmp.eq.s32.totalorder %s15, 1
      %p49 = por %p47, %p48
      %p50 = scmp.ne.s32.totalorder %s41, %s42
      %p51 = scmp.eq.s32.totalorder %s15, 0
      %p52 = por %p50, %p51
      %p53 = scmp.ne.s32.totalorder %s41, %s42
      %p54 = scmp.eq.s32.totalorder %s16, 1
      %p55 = por %p53, %p54
      %p57 = scmp.ne.s32.totalorder %s42, %s56
      %p58 = scmp.eq.s32.totalorder %s16, 0
      %p59 = por %p57, %p58
      %s61 = sadd.s32 %s60, 1
      %p64 = scmp.eq.s32.totalorder %s10, 1
      %p65 = scmp.ne.s32.totalorder %s60, %s62
      %p66 = scmp.eq.s32.totalorder %s10, 0
      %p67 = por %p65, %p66
      %p68 = scmp.ne.s32.totalorder %s60, %s62
      %p69 = scmp.eq.s32.totalorder %s15, 1
      %p70 = por %p68, %p69
      %p71 = scmp.ne.s32.totalorder %s62, %s63
      %p72 = scmp.eq.s32.totalorder %s15, 0
      %p73 = por %p71, %p72
      %p74 = scmp.ne.s32.totalorder %s62, %s63
      %p75 = scmp.eq.s32.totalorder %s16, 1
      %p76 = por %p74, %p75
      %p78 = scmp.ne.s32.totalorder %s63, %s77
      %p79 = scmp.eq.s32.totalorder %s16, 0
      %p80 = por %p78, %p79
      %s82 = sadd.s32 %s81, 1
      %p85 = scmp.eq.s32.totalorder %s10, 1
      %p86 = scmp.ne.s32.totalorder %s81, %s83
      %p87 = scmp.eq.s32.totalorder %s10, 0
      %p88 = por %p86, %p87
      %p89 = scmp.ne.s32.totalorder %s81, %s83
      %p90 = scmp.eq.s32.totalorder %s15, 1
      %p91 = por %p89, %p90
      %p92 = scmp.ne.s32.totalorder %s83, %s84
      %p93 = scmp.eq.s32.totalorder %s15, 0
      %p94 = por %p92, %p93
      %p95 = scmp.ne.s32.totalorder %s83, %s84
      %p96 = scmp.eq.s32.totalorder %s16, 1
      %p97 = por %p95, %p96
      %p99 = scmp.ne.s32.totalorder %s84, %s98
      %p100 = scmp.eq.s32.totalorder %s16, 0
      %p101 = por %p99, %p100
      %p102 = scmp.le.s32.totalorder 1, %s10
      %p103 = scmp.lt.s32.totalorder %s10, 3
      %p104 = pnand %p102, %p103
      %p105 = pneg %p104
      // Predicated region
      $region9: #{tpu_custom_call.1} parent=5 // pred_check
        _
      $region10: #{tpu_custom_call.1} parent=5 // pred_check_branch
        %107 = sbr.rel (%p104) target = $region12
      $region11: #{tpu_custom_call.1} parent=5 // pred_region
        %s108 = ssub.s32 %s10, 1
        // Predicated region
        $region13: #{tpu_custom_call.1} parent=11 // pred_check
          %p109 = pneg %p31
        $region14: #{tpu_custom_call.1} parent=11 // pred_check_branch
          %111 = sbr.rel (%p109) target = $region16
        $region15: #{tpu_custom_call.1} parent=11 // pred_region
          _
        $region16: #{tpu_custom_call.1} parent=11 // pred_fallthru
          _
        // Predicated region
        $region17: #{tpu_custom_call.1} parent=11 // pred_check
          %p112 = pneg %p52
        $region18: #{tpu_custom_call.1} parent=11 // pred_check_branch
          %114 = sbr.rel (%p112) target = $region20
        $region19: #{tpu_custom_call.1} parent=11 // pred_region
          _
        $region20: #{tpu_custom_call.1} parent=11 // pred_fallthru
          _
        // Predicated region
        $region21: #{tpu_custom_call.1} parent=11 // pred_check
          %p115 = pneg %p73
        $region22: #{tpu_custom_call.1} parent=11 // pred_check_branch
          %117 = sbr.rel (%p115) target = $region24
        $region23: #{tpu_custom_call.1} parent=11 // pred_region
          _
        $region24: #{tpu_custom_call.1} parent=11 // pred_fallthru
          _
      $region12: #{tpu_custom_call.1} parent=5 // pred_fallthru
        _
      %p118 = scmp.lt.s32.totalorder %s10, 2
      // Predicated region
      $region25: #{tpu_custom_call.1} parent=5 // pred_check
        %p119 = pneg %p118
      $region26: #{tpu_custom_call.1} parent=5 // pred_check_branch
        %121 = sbr.rel (%p119) target = $region28
      $region27: #{tpu_custom_call.1} parent=5 // pred_region
        _
      $region28: #{tpu_custom_call.1} parent=5 // pred_fallthru
        _
      %p122 = scmp.le.s32.totalorder 1, %s10
      %p123 = scmp.lt.s32.totalorder %s10, 3
      %p124 = pnand %p122, %p123
      %p125 = pneg %p124
      // Predicated region
      $region29: #{tpu_custom_call.1} parent=5 // pred_check
        _
      $region30: #{tpu_custom_call.1} parent=5 // pred_check_branch
        %127 = sbr.rel (%p124) target = $region32
      $region31: #{tpu_custom_call.1} parent=5 // pred_region
        %s128 = ssub.s32 %s10, 1
        %p129 = pneg %p31
        %p130 = pneg %p28
        %p131 = pneg %p52
        %p132 = pneg %p49
        %p133 = pneg %p73
        %p134 = pneg %p70
        %p135 = pneg %p94
        %p136 = pneg %p91
        %p137 = scmp.eq.s32.totalorder %s15, 0
        // Predicated region
        $region33: #{tpu_custom_call.1} parent=31 // pred_check
          %p138 = pneg %p137
        $region34: #{tpu_custom_call.1} parent=31 // pred_check_branch
          %140 = sbr.rel (%p138) target = $region36
        $region35: #{tpu_custom_call.1} parent=31 // pred_region
          %v141 = vld [vmem:[%s0] sm:$0xff]
          %v142 = vld [vmem:[%s0 + $0x8] sm:$0xff]
          %v143 = vld [vmem:[%s0 + $0x10] sm:$0xff]
          %v144 = vld [vmem:[%s0 + $0x18] sm:$0xff]
          %v145 = vld [vmem:[%s0 + $0x20] sm:$0xff]
          %v146 = vld [vmem:[%s0 + $0x28] sm:$0xff]
          %v147 = vld [vmem:[%s0 + $0x30] sm:$0xff]
          %v148 = vld [vmem:[%s0 + $0x38] sm:$0xff]
          %v149 = vld [vmem:[%s0 + $0x40] sm:$0xff]
          %v150 = vld [vmem:[%s0 + $0x48] sm:$0xff]
          %v151 = vld [vmem:[%s0 + $0x50] sm:$0xff]
          %v152 = vld [vmem:[%s0 + $0x58] sm:$0xff]
          %v153 = vld [vmem:[%s0 + $0x60] sm:$0xff]
          %v154 = vld [vmem:[%s0 + $0x68] sm:$0xff]
          %v155 = vld [vmem:[%s0 + $0x70] sm:$0xff]
          %v156 = vld [vmem:[%s0 + $0x78] sm:$0xff]
          %v157 = vmul.f32 %v141, %v141
          %v158 = vmul.f32 %v142, %v142
          %v159 = vmul.f32 %v143, %v143
          %v160 = vmul.f32 %v144, %v144
          %v161 = vmul.f32 %v145, %v145
          %v162 = vmul.f32 %v146, %v146
          %v163 = vmul.f32 %v147, %v147
          %v164 = vmul.f32 %v148, %v148
          %v165 = vmul.f32 %v149, %v149
          %v166 = vmul.f32 %v150, %v150
          %v167 = vmul.f32 %v151, %v151
          %v168 = vmul.f32 %v152, %v152
          %v169 = vmul.f32 %v153, %v153
          %v170 = vmul.f32 %v154, %v154
          %v171 = vmul.f32 %v155, %v155
          %v172 = vmul.f32 %v156, %v156
          %173 = vadd.xlane.f32.xlu0 %v157
          %v174 = vpop.xlane.xlu0 %173
          %175 = vadd.xlane.f32.xlu0 %v158
          %v176 = vpop.xlane.xlu0 %175
          %177 = vadd.xlane.f32.xlu0 %v159
          %v178 = vpop.xlane.xlu0 %177
          %179 = vadd.xlane.f32.xlu0 %v160
          %v180 = vpop.xlane.xlu0 %179
          %181 = vadd.xlane.f32.xlu0 %v161
          %v182 = vpop.xlane.xlu0 %181
          %183 = vadd.xlane.f32.xlu0 %v162
          %v184 = vpop.xlane.xlu0 %183
          %185 = vadd.xlane.f32.xlu0 %v163
          %v186 = vpop.xlane.xlu0 %185
          %187 = vadd.xlane.f32.xlu0 %v164
          %v188 = vpop.xlane.xlu0 %187
          %189 = vadd.xlane.f32.xlu0 %v165
          %v190 = vpop.xlane.xlu0 %189
          %191 = vadd.xlane.f32.xlu0 %v166
          %v192 = vpop.xlane.xlu0 %191
          %193 = vadd.xlane.f32.xlu0 %v167
          %v194 = vpop.xlane.xlu0 %193
          %195 = vadd.xlane.f32.xlu0 %v168
          %v196 = vpop.xlane.xlu0 %195
          %197 = vadd.xlane.f32.xlu0 %v169
          %v198 = vpop.xlane.xlu0 %197
          %199 = vadd.xlane.f32.xlu0 %v170
          %v200 = vpop.xlane.xlu0 %199
          %201 = vadd.xlane.f32.xlu0 %v171
          %v202 = vpop.xlane.xlu0 %201
          %203 = vadd.xlane.f32.xlu0 %v172
          %v204 = vpop.xlane.xlu0 %203
          %205 = vmatpush.xpose.msra.mxu0 %v172
          %206 = vmatpush.xpose.msra.mxu0 %v171
          %207 = vmatpush.xpose.msra.mxu0 %v170
          %208 = vmatpush.xpose.msra.mxu0 %v169
          %209 = vmatpush.xpose.msra.mxu0 %v168
          %210 = vmatpush.xpose.msra.mxu0 %v167
          %211 = vmatpush.xpose.msra.mxu0 %v166
          %212 = vmatpush.xpose.msra.mxu0 %v165
          %213 = vmatpush.xpose.msra.mxu0 %v164
          %214 = vmatpush.xpose.msra.mxu0 %v163
          %215 = vmatpush.xpose.msra.mxu0 %v162
          %216 = vmatpush.xpose.msra.mxu0 %v161
          %217 = vmatpush.xpose.msra.mxu0 %v160
          %218 = vmatpush.xpose.msra.mxu0 %v159
          %219 = vmatpush.xpose.msra.mxu0 %v158
          %220 = vmatpush.xpose.msra.mxu0 %v157
          %221 = vmatmul.f32.gmra.mxu0 1.0
          %v222 = vpop.f32.mrf.mxu0
          %v223 = vadd.f32 0.0, %v222
          %224 = vdwg.mxu0
          %v225 = vrsqrt.pop %v174
          %v226 = vmul.f32 %v225, %v174
          %v227 = vmul.f32 %v226, %v225
          %v228 = vmul.f32 0.5, %v227
          %v229 = vsub.f32 1.5, %v228
          %v230 = vmul.f32 %v225, %v229
          %v231 = vmul.f32 %v174, %v230
          %vm232 = vcmp.eq.f32.partialorder %v174, inf
          %v233 = vsel %vm232, %v174, %v231
          %vm234 = vcmp.eq.f32.partialorder %v174, 0.0
          %v235 = vand.u32 %v174, 2147483648
          %v236 = vsel %vm234, %v235, %v233
          %v237 = vrsqrt.pop %v176
          %v238 = vmul.f32 %v237, %v176
          %v239 = vmul.f32 %v238, %v237
          %v240 = vmul.f32 0.5, %v239
          %v241 = vsub.f32 1.5, %v240
          %v242 = vmul.f32 %v237, %v241
          %v243 = vmul.f32 %v176, %v242
          %vm244 = vcmp.eq.f32.partialorder %v176, inf
          %v245 = vsel %vm244, %v176, %v243
          %vm246 = vcmp.eq.f32.partialorder %v176, 0.0
          %v247 = vand.u32 %v176, 2147483648
          %v248 = vsel %vm246, %v247, %v245
          %v249 = vrsqrt.pop %v178
          %v250 = vmul.f32 %v249, %v178
          %v251 = vmul.f32 %v250, %v249
          %v252 = vmul.f32 0.5, %v251
          %v253 = vsub.f32 1.5, %v252
          %v254 = vmul.f32 %v249, %v253
          %v255 = vmul.f32 %v178, %v254
          %vm256 = vcmp.eq.f32.partialorder %v178, inf
          %v257 = vsel %vm256, %v178, %v255
          %vm258 = vcmp.eq.f32.partialorder %v178, 0.0
          %v259 = vand.u32 %v178, 2147483648
          %v260 = vsel %vm258, %v259, %v257
          %v261 = vrsqrt.pop %v180
          %v262 = vmul.f32 %v261, %v180
          %v263 = vmul.f32 %v262, %v261
          %v264 = vmul.f32 0.5, %v263
          %v265 = vsub.f32 1.5, %v264
          %v266 = vmul.f32 %v261, %v265
          %v267 = vmul.f32 %v180, %v266
          %vm268 = vcmp.eq.f32.partialorder %v180, inf
          %v269 = vsel %vm268, %v180, %v267
          %vm270 = vcmp.eq.f32.partialorder %v180, 0.0
          %v271 = vand.u32 %v180, 2147483648
          %v272 = vsel %vm270, %v271, %v269
          %v273 = vrsqrt.pop %v182
          %v274 = vmul.f32 %v273, %v182
          %v275 = vmul.f32 %v274, %v273
          %v276 = vmul.f32 0.5, %v275
          %v277 = vsub.f32 1.5, %v276
          %v278 = vmul.f32 %v273, %v277
          %v279 = vmul.f32 %v182, %v278
          %vm280 = vcmp.eq.f32.partialorder %v182, inf
          %v281 = vsel %vm280, %v182, %v279
          %vm282 = vcmp.eq.f32.partialorder %v182, 0.0
          %v283 = vand.u32 %v182, 2147483648
          %v284 = vsel %vm282, %v283, %v281
          %v285 = vrsqrt.pop %v184
          %v286 = vmul.f32 %v285, %v184
          %v287 = vmul.f32 %v286, %v285
          %v288 = vmul.f32 0.5, %v287
          %v289 = vsub.f32 1.5, %v288
          %v290 = vmul.f32 %v285, %v289
          %v291 = vmul.f32 %v184, %v290
          %vm292 = vcmp.eq.f32.partialorder %v184, inf
          %v293 = vsel %vm292, %v184, %v291
          %vm294 = vcmp.eq.f32.partialorder %v184, 0.0
          %v295 = vand.u32 %v184, 2147483648
          %v296 = vsel %vm294, %v295, %v293
          %v297 = vrsqrt.pop %v186
          %v298 = vmul.f32 %v297, %v186
          %v299 = vmul.f32 %v298, %v297
          %v300 = vmul.f32 0.5, %v299
          %v301 = vsub.f32 1.5, %v300
          %v302 = vmul.f32 %v297, %v301
          %v303 = vmul.f32 %v186, %v302
          %vm304 = vcmp.eq.f32.partialorder %v186, inf
          %v305 = vsel %vm304, %v186, %v303
          %vm306 = vcmp.eq.f32.partialorder %v186, 0.0
          %v307 = vand.u32 %v186, 2147483648
          %v308 = vsel %vm306, %v307, %v305
          %v309 = vrsqrt.pop %v188
          %v310 = vmul.f32 %v309, %v188
          %v311 = vmul.f32 %v310, %v309
          %v312 = vmul.f32 0.5, %v311
          %v313 = vsub.f32 1.5, %v312
          %v314 = vmul.f32 %v309, %v313
          %v315 = vmul.f32 %v188, %v314
          %vm316 = vcmp.eq.f32.partialorder %v188, inf
          %v317 = vsel %vm316, %v188, %v315
          %vm318 = vcmp.eq.f32.partialorder %v188, 0.0
          %v319 = vand.u32 %v188, 2147483648
          %v320 = vsel %vm318, %v319, %v317
          %v321 = vrsqrt.pop %v190
          %v322 = vmul.f32 %v321, %v190
          %v323 = vmul.f32 %v322, %v321
          %v324 = vmul.f32 0.5, %v323
          %v325 = vsub.f32 1.5, %v324
          %v326 = vmul.f32 %v321, %v325
          %v327 = vmul.f32 %v190, %v326
          %vm328 = vcmp.eq.f32.partialorder %v190, inf
          %v329 = vsel %vm328, %v190, %v327
          %vm330 = vcmp.eq.f32.partialorder %v190, 0.0
          %v331 = vand.u32 %v190, 2147483648
          %v332 = vsel %vm330, %v331, %v329
          %v333 = vrsqrt.pop %v192
          %v334 = vmul.f32 %v333, %v192
          %v335 = vmul.f32 %v334, %v333
          %v336 = vmul.f32 0.5, %v335
          %v337 = vsub.f32 1.5, %v336
          %v338 = vmul.f32 %v333, %v337
          %v339 = vmul.f32 %v192, %v338
          %vm340 = vcmp.eq.f32.partialorder %v192, inf
          %v341 = vsel %vm340, %v192, %v339
          %vm342 = vcmp.eq.f32.partialorder %v192, 0.0
          %v343 = vand.u32 %v192, 2147483648
          %v344 = vsel %vm342, %v343, %v341
          %v345 = vrsqrt.pop %v194
          %v346 = vmul.f32 %v345, %v194
          %v347 = vmul.f32 %v346, %v345
          %v348 = vmul.f32 0.5, %v347
          %v349 = vsub.f32 1.5, %v348
          %v350 = vmul.f32 %v345, %v349
          %v351 = vmul.f32 %v194, %v350
          %vm352 = vcmp.eq.f32.partialorder %v194, inf
          %v353 = vsel %vm352, %v194, %v351
          %vm354 = vcmp.eq.f32.partialorder %v194, 0.0
          %v355 = vand.u32 %v194, 2147483648
          %v356 = vsel %vm354, %v355, %v353
          %v357 = vrsqrt.pop %v196
          %v358 = vmul.f32 %v357, %v196
          %v359 = vmul.f32 %v358, %v357
          %v360 = vmul.f32 0.5, %v359
          %v361 = vsub.f32 1.5, %v360
          %v362 = vmul.f32 %v357, %v361
          %v363 = vmul.f32 %v196, %v362
          %vm364 = vcmp.eq.f32.partialorder %v196, inf
          %v365 = vsel %vm364, %v196, %v363
          %vm366 = vcmp.eq.f32.partialorder %v196, 0.0
          %v367 = vand.u32 %v196, 2147483648
          %v368 = vsel %vm366, %v367, %v365
          %v369 = vrsqrt.pop %v198
          %v370 = vmul.f32 %v369, %v198
          %v371 = vmul.f32 %v370, %v369
          %v372 = vmul.f32 0.5, %v371
          %v373 = vsub.f32 1.5, %v372
          %v374 = vmul.f32 %v369, %v373
          %v375 = vmul.f32 %v198, %v374
          %vm376 = vcmp.eq.f32.partialorder %v198, inf
          %v377 = vsel %vm376, %v198, %v375
          %vm378 = vcmp.eq.f32.partialorder %v198, 0.0
          %v379 = vand.u32 %v198, 2147483648
          %v380 = vsel %vm378, %v379, %v377
          %v381 = vrsqrt.pop %v200
          %v382 = vmul.f32 %v381, %v200
          %v383 = vmul.f32 %v382, %v381
          %v384 = vmul.f32 0.5, %v383
          %v385 = vsub.f32 1.5, %v384
          %v386 = vmul.f32 %v381, %v385
          %v387 = vmul.f32 %v200, %v386
          %vm388 = vcmp.eq.f32.partialorder %v200, inf
          %v389 = vsel %vm388, %v200, %v387
          %vm390 = vcmp.eq.f32.partialorder %v200, 0.0
          %v391 = vand.u32 %v200, 2147483648
          %v392 = vsel %vm390, %v391, %v389
          %v393 = vrsqrt.pop %v202
          %v394 = vmul.f32 %v393, %v202
          %v395 = vmul.f32 %v394, %v393
          %v396 = vmul.f32 0.5, %v395
          %v397 = vsub.f32 1.5, %v396
          %v398 = vmul.f32 %v393, %v397
          %v399 = vmul.f32 %v202, %v398
          %vm400 = vcmp.eq.f32.partialorder %v202, inf
          %v401 = vsel %vm400, %v202, %v399
          %vm402 = vcmp.eq.f32.partialorder %v202, 0.0
          %v403 = vand.u32 %v202, 2147483648
          %v404 = vsel %vm402, %v403, %v401
          %v405 = vrsqrt.pop %v204
          %v406 = vmul.f32 %v405, %v204
          %v407 = vmul.f32 %v406, %v405
          %v408 = vmul.f32 0.5, %v407
          %v409 = vsub.f32 1.5, %v408
          %v410 = vmul.f32 %v405, %v409
          %v411 = vmul.f32 %v204, %v410
          %vm412 = vcmp.eq.f32.partialorder %v204, inf
          %v413 = vsel %vm412, %v204, %v411
          %vm414 = vcmp.eq.f32.partialorder %v204, 0.0
          %v415 = vand.u32 %v204, 2147483648
          %v416 = vsel %vm414, %v415, %v413
          %v417 = vmax.f32 %v236, 1e-12
          %v418 = vmax.f32 %v248, 1e-12
          %v419 = vmax.f32 %v260, 1e-12
          %v420 = vmax.f32 %v272, 1e-12
          %v421 = vmax.f32 %v284, 1e-12
          %v422 = vmax.f32 %v296, 1e-12
          %v423 = vmax.f32 %v308, 1e-12
          %v424 = vmax.f32 %v320, 1e-12
          %v425 = vmax.f32 %v332, 1e-12
          %v426 = vmax.f32 %v344, 1e-12
          %v427 = vmax.f32 %v356, 1e-12
          %v428 = vmax.f32 %v368, 1e-12
          %v429 = vmax.f32 %v380, 1e-12
          %v430 = vmax.f32 %v392, 1e-12
          %v431 = vmax.f32 %v404, 1e-12
          %v432 = vmax.f32 %v416, 1e-12
          %v433 = vrcp.pop %v417
          %v434 = vmul.f32 %v417, %v433
          %v435 = vsub.f32 1.0, %v434
          %v436 = vmul.f32 %v433, %v435
          %v437 = vadd.f32 %v433, %v436
          %vm438 = vweird.f32 %v417
          %vm439 = vweird.f32 %v433
          %vm440 = vmor %vm438, %vm439
          %v441 = vsel %vm440, %v433, %v437
          %v442 = vand.u32 2147483647, %v417
          %vm443 = vcmp.eq.f32.partialorder %v442, 8.507059e+37
          %v444 = vand.u32 %v417, 2147483648
          %v445 = vor.u32 1.1754944e-38, %v444
          %v446 = vsel %vm443, %v445, %v441
          %v447 = vmul.f32 1.0, %v446
          %v448 = vrcp.pop %v418
          %v449 = vmul.f32 %v418, %v448
          %v450 = vsub.f32 1.0, %v449
          %v451 = vmul.f32 %v448, %v450
          %v452 = vadd.f32 %v448, %v451
          %vm453 = vweird.f32 %v418
          %vm454 = vweird.f32 %v448
          %vm455 = vmor %vm453, %vm454
          %v456 = vsel %vm455, %v448, %v452
          %v457 = vand.u32 2147483647, %v418
          %vm458 = vcmp.eq.f32.partialorder %v457, 8.507059e+37
          %v459 = vand.u32 %v418, 2147483648
          %v460 = vor.u32 1.1754944e-38, %v459
          %v461 = vsel %vm458, %v460, %v456
          %v462 = vmul.f32 1.0, %v461
          %v463 = vrcp.pop %v419
          %v464 = vmul.f32 %v419, %v463
          %v465 = vsub.f32 1.0, %v464
          %v466 = vmul.f32 %v463, %v465
          %v467 = vadd.f32 %v463, %v466
          %vm468 = vweird.f32 %v419
          %vm469 = vweird.f32 %v463
          %vm470 = vmor %vm468, %vm469
          %v471 = vsel %vm470, %v463, %v467
          %v472 = vand.u32 2147483647, %v419
          %vm473 = vcmp.eq.f32.partialorder %v472, 8.507059e+37
          %v474 = vand.u32 %v419, 2147483648
          %v475 = vor.u32 1.1754944e-38, %v474
          %v476 = vsel %vm473, %v475, %v471
          %v477 = vmul.f32 1.0, %v476
          %v478 = vrcp.pop %v420
          %v479 = vmul.f32 %v420, %v478
          %v480 = vsub.f32 1.0, %v479
          %v481 = vmul.f32 %v478, %v480
          %v482 = vadd.f32 %v478, %v481
          %vm483 = vweird.f32 %v420
          %vm484 = vweird.f32 %v478
          %vm485 = vmor %vm483, %vm484
          %v486 = vsel %vm485, %v478, %v482
          %v487 = vand.u32 2147483647, %v420
          %vm488 = vcmp.eq.f32.partialorder %v487, 8.507059e+37
          %v489 = vand.u32 %v420, 2147483648
          %v490 = vor.u32 1.1754944e-38, %v489
          %v491 = vsel %vm488, %v490, %v486
          %v492 = vmul.f32 1.0, %v491
          %v493 = vrcp.pop %v421
          %v494 = vmul.f32 %v421, %v493
          %v495 = vsub.f32 1.0, %v494
          %v496 = vmul.f32 %v493, %v495
          %v497 = vadd.f32 %v493, %v496
          %vm498 = vweird.f32 %v421
          %vm499 = vweird.f32 %v493
          %vm500 = vmor %vm498, %vm499
          %v501 = vsel %vm500, %v493, %v497
          %v502 = vand.u32 2147483647, %v421
          %vm503 = vcmp.eq.f32.partialorder %v502, 8.507059e+37
          %v504 = vand.u32 %v421, 2147483648
          %v505 = vor.u32 1.1754944e-38, %v504
          %v506 = vsel %vm503, %v505, %v501
          %v507 = vmul.f32 1.0, %v506
          %v508 = vrcp.pop %v422
          %v509 = vmul.f32 %v422, %v508
          %v510 = vsub.f32 1.0, %v509
          %v511 = vmul.f32 %v508, %v510
          %v512 = vadd.f32 %v508, %v511
          %vm513 = vweird.f32 %v422
          %vm514 = vweird.f32 %v508
          %vm515 = vmor %vm513, %vm514
          %v516 = vsel %vm515, %v508, %v512
          %v517 = vand.u32 2147483647, %v422
          %vm518 = vcmp.eq.f32.partialorder %v517, 8.507059e+37
          %v519 = vand.u32 %v422, 2147483648
          %v520 = vor.u32 1.1754944e-38, %v519
          %v521 = vsel %vm518, %v520, %v516
          %v522 = vmul.f32 1.0, %v521
          %v523 = vrcp.pop %v423
          %v524 = vmul.f32 %v423, %v523
          %v525 = vsub.f32 1.0, %v524
          %v526 = vmul.f32 %v523, %v525
          %v527 = vadd.f32 %v523, %v526
          %vm528 = vweird.f32 %v423
          %vm529 = vweird.f32 %v523
          %vm530 = vmor %vm528, %vm529
          %v531 = vsel %vm530, %v523, %v527
          %v532 = vand.u32 2147483647, %v423
          %vm533 = vcmp.eq.f32.partialorder %v532, 8.507059e+37
          %v534 = vand.u32 %v423, 2147483648
          %v535 = vor.u32 1.1754944e-38, %v534
          %v536 = vsel %vm533, %v535, %v531
          %v537 = vmul.f32 1.0, %v536
          %v538 = vrcp.pop %v424
          %v539 = vmul.f32 %v424, %v538
          %v540 = vsub.f32 1.0, %v539
          %v541 = vmul.f32 %v538, %v540
          %v542 = vadd.f32 %v538, %v541
          %vm543 = vweird.f32 %v424
          %vm544 = vweird.f32 %v538
          %vm545 = vmor %vm543, %vm544
          %v546 = vsel %vm545, %v538, %v542
          %v547 = vand.u32 2147483647, %v424
          %vm548 = vcmp.eq.f32.partialorder %v547, 8.507059e+37
          %v549 = vand.u32 %v424, 2147483648
          %v550 = vor.u32 1.1754944e-38, %v549
          %v551 = vsel %vm548, %v550, %v546
          %v552 = vmul.f32 1.0, %v551
          %v553 = vrcp.pop %v425
          %v554 = vmul.f32 %v425, %v553
          %v555 = vsub.f32 1.0, %v554
          %v556 = vmul.f32 %v553, %v555
          %v557 = vadd.f32 %v553, %v556
          %vm558 = vweird.f32 %v425
          %vm559 = vweird.f32 %v553
          %vm560 = vmor %vm558, %vm559
          %v561 = vsel %vm560, %v553, %v557
          %v562 = vand.u32 2147483647, %v425
          %vm563 = vcmp.eq.f32.partialorder %v562, 8.507059e+37
          %v564 = vand.u32 %v425, 2147483648
          %v565 = vor.u32 1.1754944e-38, %v564
          %v566 = vsel %vm563, %v565, %v561
          %v567 = vmul.f32 1.0, %v566
          %v568 = vrcp.pop %v426
          %v569 = vmul.f32 %v426, %v568
          %v570 = vsub.f32 1.0, %v569
          %v571 = vmul.f32 %v568, %v570
          %v572 = vadd.f32 %v568, %v571
          %vm573 = vweird.f32 %v426
          %vm574 = vweird.f32 %v568
          %vm575 = vmor %vm573, %vm574
          %v576 = vsel %vm575, %v568, %v572
          %v577 = vand.u32 2147483647, %v426
          %vm578 = vcmp.eq.f32.partialorder %v577, 8.507059e+37
          %v579 = vand.u32 %v426, 2147483648
          %v580 = vor.u32 1.1754944e-38, %v579
          %v581 = vsel %vm578, %v580, %v576
          %v582 = vmul.f32 1.0, %v581
          %v583 = vrcp.pop %v427
          %v584 = vmul.f32 %v427, %v583
          %v585 = vsub.f32 1.0, %v584
          %v586 = vmul.f32 %v583, %v585
          %v587 = vadd.f32 %v583, %v586
          %vm588 = vweird.f32 %v427
          %vm589 = vweird.f32 %v583
          %vm590 = vmor %vm588, %vm589
          %v591 = vsel %vm590, %v583, %v587
          %v592 = vand.u32 2147483647, %v427
          %vm593 = vcmp.eq.f32.partialorder %v592, 8.507059e+37
          %v594 = vand.u32 %v427, 2147483648
          %v595 = vor.u32 1.1754944e-38, %v594
          %v596 = vsel %vm593, %v595, %v591
          %v597 = vmul.f32 1.0, %v596
          %v598 = vrcp.pop %v428
          %v599 = vmul.f32 %v428, %v598
          %v600 = vsub.f32 1.0, %v599
          %v601 = vmul.f32 %v598, %v600
          %v602 = vadd.f32 %v598, %v601
          %vm603 = vweird.f32 %v428
          %vm604 = vweird.f32 %v598
          %vm605 = vmor %vm603, %vm604
          %v606 = vsel %vm605, %v598, %v602
          %v607 = vand.u32 2147483647, %v428
          %vm608 = vcmp.eq.f32.partialorder %v607, 8.507059e+37
          %v609 = vand.u32 %v428, 2147483648
          %v610 = vor.u32 1.1754944e-38, %v609
          %v611 = vsel %vm608, %v610, %v606
          %v612 = vmul.f32 1.0, %v611
          %v613 = vrcp.pop %v429
          %v614 = vmul.f32 %v429, %v613
          %v615 = vsub.f32 1.0, %v614
          %v616 = vmul.f32 %v613, %v615
          %v617 = vadd.f32 %v613, %v616
          %vm618 = vweird.f32 %v429
          %vm619 = vweird.f32 %v613
          %vm620 = vmor %vm618, %vm619
          %v621 = vsel %vm620, %v613, %v617
          %v622 = vand.u32 2147483647, %v429
          %vm623 = vcmp.eq.f32.partialorder %v622, 8.507059e+37
          %v624 = vand.u32 %v429, 2147483648
          %v625 = vor.u32 1.1754944e-38, %v624
          %v626 = vsel %vm623, %v625, %v621
          %v627 = vmul.f32 1.0, %v626
          %v628 = vrcp.pop %v430
          %v629 = vmul.f32 %v430, %v628
          %v630 = vsub.f32 1.0, %v629
          %v631 = vmul.f32 %v628, %v630
          %v632 = vadd.f32 %v628, %v631
          %vm633 = vweird.f32 %v430
          %vm634 = vweird.f32 %v628
          %vm635 = vmor %vm633, %vm634
          %v636 = vsel %vm635, %v628, %v632
          %v637 = vand.u32 2147483647, %v430
          %vm638 = vcmp.eq.f32.partialorder %v637, 8.507059e+37
          %v639 = vand.u32 %v430, 2147483648
          %v640 = vor.u32 1.1754944e-38, %v639
          %v641 = vsel %vm638, %v640, %v636
          %v642 = vmul.f32 1.0, %v641
          %v643 = vrcp.pop %v431
          %v644 = vmul.f32 %v431, %v643
          %v645 = vsub.f32 1.0, %v644
          %v646 = vmul.f32 %v643, %v645
          %v647 = vadd.f32 %v643, %v646
          %vm648 = vweird.f32 %v431
          %vm649 = vweird.f32 %v643
          %vm650 = vmor %vm648, %vm649
          %v651 = vsel %vm650, %v643, %v647
          %v652 = vand.u32 2147483647, %v431
          %vm653 = vcmp.eq.f32.partialorder %v652, 8.507059e+37
          %v654 = vand.u32 %v431, 2147483648
          %v655 = vor.u32 1.1754944e-38, %v654
          %v656 = vsel %vm653, %v655, %v651
          %v657 = vmul.f32 1.0, %v656
          %v658 = vrcp.pop %v432
          %v659 = vmul.f32 %v432, %v658
          %v660 = vsub.f32 1.0, %v659
          %v661 = vmul.f32 %v658, %v660
          %v662 = vadd.f32 %v658, %v661
          %vm663 = vweird.f32 %v432
          %vm664 = vweird.f32 %v658
          %vm665 = vmor %vm663, %vm664
          %v666 = vsel %vm665, %v658, %v662
          %v667 = vand.u32 2147483647, %v432
          %vm668 = vcmp.eq.f32.partialorder %v667, 8.507059e+37
          %v669 = vand.u32 %v432, 2147483648
          %v670 = vor.u32 1.1754944e-38, %v669
          %v671 = vsel %vm668, %v670, %v666
          %v672 = vmul.f32 1.0, %v671
          %vm673 = vcmask 7168
          %674 = vst.msk [vmem:[#allocation2] sm:$0xff] %vm673, %v447
          %675 = vst.msk [vmem:[#allocation2 + $0x8] sm:$0xff] %vm673, %v462
          %676 = vst.msk [vmem:[#allocation2 + $0x10] sm:$0xff] %vm673, %v477
          %677 = vst.msk [vmem:[#allocation2 + $0x18] sm:$0xff] %vm673, %v492
          %678 = vst.msk [vmem:[#allocation2 + $0x20] sm:$0xff] %vm673, %v507
          %679 = vst.msk [vmem:[#allocation2 + $0x28] sm:$0xff] %vm673, %v522
          %680 = vst.msk [vmem:[#allocation2 + $0x30] sm:$0xff] %vm673, %v537
          %681 = vst.msk [vmem:[#allocation2 + $0x38] sm:$0xff] %vm673, %v552
          %682 = vst.msk [vmem:[#allocation2 + $0x40] sm:$0xff] %vm673, %v567
          %683 = vst.msk [vmem:[#allocation2 + $0x48] sm:$0xff] %vm673, %v582
          %684 = vst.msk [vmem:[#allocation2 + $0x50] sm:$0xff] %vm673, %v597
          %685 = vst.msk [vmem:[#allocation2 + $0x58] sm:$0xff] %vm673, %v612
          %686 = vst.msk [vmem:[#allocation2 + $0x60] sm:$0xff] %vm673, %v627
          %687 = vst.msk [vmem:[#allocation2 + $0x68] sm:$0xff] %vm673, %v642
          %688 = vst.msk [vmem:[#allocation2 + $0x70] sm:$0xff] %vm673, %v657
          %689 = vst.msk [vmem:[#allocation2 + $0x78] sm:$0xff] %vm673, %v672
          %v690 = vrsqrt.pop %v223
          %v691 = vmul.f32 %v690, %v223
          %v692 = vmul.f32 %v691, %v690
          %v693 = vmul.f32 0.5, %v692
          %v694 = vsub.f32 1.5, %v693
          %v695 = vmul.f32 %v690, %v694
          %v696 = vmul.f32 %v223, %v695
          %vm697 = vcmp.eq.f32.partialorder %v223, inf
          %v698 = vsel %vm697, %v223, %v696
          %vm699 = vcmp.eq.f32.partialorder %v223, 0.0
          %v700 = vand.u32 %v223, 2147483648
          %v701 = vsel %vm699, %v700, %v698
          %v702 = vmax.f32 %v701, 1e-12
          %v703 = vrcp.pop %v702
          %v704 = vmul.f32 %v702, %v703
          %v705 = vsub.f32 1.0, %v704
          %v706 = vmul.f32 %v703, %v705
          %v707 = vadd.f32 %v703, %v706
          %vm708 = vweird.f32 %v702
          %vm709 = vweird.f32 %v703
          %vm710 = vmor %vm708, %vm709
          %v711 = vsel %vm710, %v703, %v707
          %v712 = vand.u32 2147483647, %v702
          %vm713 = vcmp.eq.f32.partialorder %v712, 8.507059e+37
          %v714 = vand.u32 %v702, 2147483648
          %v715 = vor.u32 1.1754944e-38, %v714
          %v716 = vsel %vm713, %v715, %v711
          %v717 = vmul.f32 1.0, %v716
          %718 = vst [vmem:[#allocation3] sm:$0x1] %v717
          %vm719 = vcmask 0
          %720 = vst.msk [vmem:[#allocation4] sm:$0x1] %vm719, 0.0
          %721 = vst.msk [vmem:[#allocation5] sm:$0x1] %vm719, 0.0
          %722 = vst.msk [vmem:[#allocation6] sm:$0x1] %vm719, 0.0
          %723 = vst.msk [vmem:[#allocation7] sm:$0x1] %vm719, 0.0
        $region36: #{tpu_custom_call.1} parent=31 // pred_fallthru
          _
        %s724 = smul.u32 %s15, 64
        %s725 = scalar_lea.vmem %s0, %s724
        %v726 = vld [vmem:[%s725] sm:$0xff]
        %v727 = vld [vmem:[%s725 + $0x8] sm:$0xff]
        %v728 = vld [vmem:[%s725 + $0x10] sm:$0xff]
        %v729 = vld [vmem:[%s725 + $0x18] sm:$0xff]
        %v730 = vld [vmem:[%s725 + $0x20] sm:$0xff]
        %v731 = vld [vmem:[%s725 + $0x28] sm:$0xff]
        %v732 = vld [vmem:[%s725 + $0x30] sm:$0xff]
        %v733 = vld [vmem:[%s725 + $0x38] sm:$0xff]
        %v734 = vld [vmem:[%s0] sm:$0xff]
        %v735 = vld [vmem:[%s0 + $0x8] sm:$0xff]
        %v736 = vld [vmem:[%s0 + $0x10] sm:$0xff]
        %v737 = vld [vmem:[%s0 + $0x18] sm:$0xff]
        %v738 = vld [vmem:[%s0 + $0x20] sm:$0xff]
        %v739 = vld [vmem:[%s0 + $0x28] sm:$0xff]
        %v740 = vld [vmem:[%s0 + $0x30] sm:$0xff]
        %v741 = vld [vmem:[%s0 + $0x38] sm:$0xff]
        %v742 = vld [vmem:[%s0 + $0x40] sm:$0xff]
        %v743 = vld [vmem:[%s0 + $0x48] sm:$0xff]
        %v744 = vld [vmem:[%s0 + $0x50] sm:$0xff]
        %v745 = vld [vmem:[%s0 + $0x58] sm:$0xff]
        %v746 = vld [vmem:[%s0 + $0x60] sm:$0xff]
        %v747 = vld [vmem:[%s0 + $0x68] sm:$0xff]
        %v748 = vld [vmem:[%s0 + $0x70] sm:$0xff]
        %v749 = vld [vmem:[%s0 + $0x78] sm:$0xff]
        %750 = vmatpush.xpose.msra.mxu0 %v749
        %751 = vmatpush.xpose.msra.mxu0 %v748
        %752 = vmatpush.xpose.msra.mxu0 %v747
        %753 = vmatpush.xpose.msra.mxu0 %v746
        %754 = vmatpush.xpose.msra.mxu0 %v745
        %755 = vmatpush.xpose.msra.mxu0 %v744
        %756 = vmatpush.xpose.msra.mxu0 %v743
        %757 = vmatpush.xpose.msra.mxu0 %v742
        %758 = vmatpush.xpose.msra.mxu0 %v741
        %759 = vmatpush.xpose.msra.mxu0 %v740
        %760 = vmatpush.xpose.msra.mxu0 %v739
        %761 = vmatpush.xpose.msra.mxu0 %v738
        %762 = vmatpush.xpose.msra.mxu0 %v737
        %763 = vmatpush.xpose.msra.mxu0 %v736
        %764 = vmatpush.xpose.msra.mxu0 %v735
        %765 = vmatpush.xpose.msra.mxu0 %v734
        %766 = vmatmul.f32.gmra.mxu0 %v726
        %v767 = vpop.f32.mrf.mxu0
        %v768 = vadd.f32 0.0, %v767
        %769 = vmatmul.f32.gmra.mxu0 %v727
        %v770 = vpop.f32.mrf.mxu0
        %v771 = vadd.f32 0.0, %v770
        %772 = vmatmul.f32.gmra.mxu0 %v728
        %v773 = vpop.f32.mrf.mxu0
        %v774 = vadd.f32 0.0, %v773
        %775 = vmatmul.f32.gmra.mxu0 %v729
        %v776 = vpop.f32.mrf.mxu0
        %v777 = vadd.f32 0.0, %v776
        %778 = vmatmul.f32.gmra.mxu0 %v730
        %v779 = vpop.f32.mrf.mxu0
        %v780 = vadd.f32 0.0, %v779
        %781 = vmatmul.f32.gmra.mxu0 %v731
        %v782 = vpop.f32.mrf.mxu0
        %v783 = vadd.f32 0.0, %v782
        %784 = vmatmul.f32.gmra.mxu0 %v732
        %v785 = vpop.f32.mrf.mxu0
        %v786 = vadd.f32 0.0, %v785
        %787 = vmatmul.f32.gmra.mxu0 %v733
        %v788 = vpop.f32.mrf.mxu0
        %v789 = vadd.f32 0.0, %v788
        %790 = vdwg.mxu0
        %s791 = scalar_lea.vmem [#allocation2], %s724
        %v792 = vld [vmem:[%s791] sm:$0xff]
        %v793 = vld [vmem:[%s791 + $0x8] sm:$0xff]
        %v794 = vld [vmem:[%s791 + $0x10] sm:$0xff]
        %v795 = vld [vmem:[%s791 + $0x18] sm:$0xff]
        %v796 = vld [vmem:[%s791 + $0x20] sm:$0xff]
        %v797 = vld [vmem:[%s791 + $0x28] sm:$0xff]
        %v798 = vld [vmem:[%s791 + $0x30] sm:$0xff]
        %v799 = vld [vmem:[%s791 + $0x38] sm:$0xff]
        %801 = vset.pattern.permute.xlu0 0
        %802 = vperm.xlu0 %801, %v792
        %v803 = vpop.permute.xlu0 %802
        %806 = vset.pattern.permute.xlu0 0
        %807 = vperm.xlu0 %806, %v793
        %v808 = vpop.permute.xlu0 %807
        %811 = vset.pattern.permute.xlu0 0
        %812 = vperm.xlu0 %811, %v794
        %v813 = vpop.permute.xlu0 %812
        %816 = vset.pattern.permute.xlu0 0
        %817 = vperm.xlu0 %816, %v795
        %v818 = vpop.permute.xlu0 %817
        %821 = vset.pattern.permute.xlu0 0
        %822 = vperm.xlu0 %821, %v796
        %v823 = vpop.permute.xlu0 %822
        %826 = vset.pattern.permute.xlu0 0
        %827 = vperm.xlu0 %826, %v797
        %v828 = vpop.permute.xlu0 %827
        %831 = vset.pattern.permute.xlu0 0
        %832 = vperm.xlu0 %831, %v798
        %v833 = vpop.permute.xlu0 %832
        %836 = vset.pattern.permute.xlu0 0
        %837 = vperm.xlu0 %836, %v799
        %v838 = vpop.permute.xlu0 %837
        %v840 = vmul.f32 %v768, %v803
        %v841 = vmul.f32 %v771, %v808
        %v842 = vmul.f32 %v774, %v813
        %v843 = vmul.f32 %v777, %v818
        %v844 = vmul.f32 %v780, %v823
        %v845 = vmul.f32 %v783, %v828
        %v846 = vmul.f32 %v786, %v833
        %v847 = vmul.f32 %v789, %v838
        %v848 = vld [vmem:[#allocation3] sm:$0x1]
        %v850 = vperm.slane %v848, 0
        %v852 = vmul.f32 %v840, %v850
        %v853 = vmul.f32 %v841, %v850
        %v854 = vmul.f32 %v842, %v850
        %v855 = vmul.f32 %v843, %v850
        %v856 = vmul.f32 %v844, %v850
        %v857 = vmul.f32 %v845, %v850
        %v858 = vmul.f32 %v846, %v850
        %v859 = vmul.f32 %v847, %v850
        %s860 = scalar_lea.vmem %s1, %s724
        %v861 = vld [vmem:[%s860] sm:$0xff]
        %v862 = vld [vmem:[%s860 + $0x8] sm:$0xff]
        %v863 = vld [vmem:[%s860 + $0x10] sm:$0xff]
        %v864 = vld [vmem:[%s860 + $0x18] sm:$0xff]
        %v865 = vld [vmem:[%s860 + $0x20] sm:$0xff]
        %v866 = vld [vmem:[%s860 + $0x28] sm:$0xff]
        %v867 = vld [vmem:[%s860 + $0x30] sm:$0xff]
        %v868 = vld [vmem:[%s860 + $0x38] sm:$0xff]
        %v869 = vld [vmem:[%s2] sm:$0x1]
        %870 = vset.pattern.permute.xlu0 0
        %871 = vperm.xlu0 %870, %v861
        %v872 = vpop.permute.xlu0 %871
        %873 = vset.pattern.permute.xlu0 0
        %874 = vperm.xlu0 %873, %v862
        %v875 = vpop.permute.xlu0 %874
        %876 = vset.pattern.permute.xlu0 0
        %877 = vperm.xlu0 %876, %v863
        %v878 = vpop.permute.xlu0 %877
        %879 = vset.pattern.permute.xlu0 0
        %880 = vperm.xlu0 %879, %v864
        %v881 = vpop.permute.xlu0 %880
        %882 = vset.pattern.permute.xlu0 0
        %883 = vperm.xlu0 %882, %v865
        %v884 = vpop.permute.xlu0 %883
        %885 = vset.pattern.permute.xlu0 0
        %886 = vperm.xlu0 %885, %v866
        %v887 = vpop.permute.xlu0 %886
        %888 = vset.pattern.permute.xlu0 0
        %889 = vperm.xlu0 %888, %v867
        %v890 = vpop.permute.xlu0 %889
        %891 = vset.pattern.permute.xlu0 0
        %892 = vperm.xlu0 %891, %v868
        %v893 = vpop.permute.xlu0 %892
        %v894 = vperm.slane %v869, 0
        %vm895 = vcmp.eq.s32.totalorder %v872, %v894
        %vm896 = vcmp.eq.s32.totalorder %v875, %v894
        %vm897 = vcmp.eq.s32.totalorder %v878, %v894
        %vm898 = vcmp.eq.s32.totalorder %v881, %v894
        %vm899 = vcmp.eq.s32.totalorder %v884, %v894
        %vm900 = vcmp.eq.s32.totalorder %v887, %v894
        %vm901 = vcmp.eq.s32.totalorder %v890, %v894
        %vm902 = vcmp.eq.s32.totalorder %v893, %v894
        %v903 = vlaneseq
        %v904 = vshrl.u32 %v903, 7
        %v905 = vadd.s32 %v904, 8
        %v906 = vadd.s32 %v904, 16
        %v907 = vadd.s32 %v904, 24
        %v908 = vadd.s32 %v904, 32
        %v909 = vadd.s32 %v904, 40
        %v910 = vadd.s32 %v904, 48
        %v911 = vadd.s32 %v904, 56
        %v912 = vstv %s724
        %v913 = vadd.s32 %v904, %v912
        %v914 = vadd.s32 %v905, %v912
        %v915 = vadd.s32 %v906, %v912
        %v916 = vadd.s32 %v907, %v912
        %v917 = vadd.s32 %v908, %v912
        %v918 = vadd.s32 %v909, %v912
        %v919 = vadd.s32 %v910, %v912
        %v920 = vadd.s32 %v911, %v912
        %v921 = vlaneseq
        %v922 = vand.u32 %v921, 127
        %vm923 = vcmp.ne.s32.totalorder %v913, %v922
        %vm924 = vcmp.ne.s32.totalorder %v914, %v922
        %vm925 = vcmp.ne.s32.totalorder %v915, %v922
        %vm926 = vcmp.ne.s32.totalorder %v916, %v922
        %vm927 = vcmp.ne.s32.totalorder %v917, %v922
        %vm928 = vcmp.ne.s32.totalorder %v918, %v922
        %vm929 = vcmp.ne.s32.totalorder %v919, %v922
        %vm930 = vcmp.ne.s32.totalorder %v920, %v922
        %v931 = vld [vmem:[#allocation4] sm:$0x1]
        %vm932 = vmand %vm895, %vm923
        %vm933 = vmand %vm896, %vm924
        %vm934 = vmand %vm897, %vm925
        %vm935 = vmand %vm898, %vm926
        %vm936 = vmand %vm899, %vm927
        %vm937 = vmand %vm900, %vm928
        %vm938 = vmand %vm901, %vm929
        %vm939 = vmand %vm902, %vm930
        %v940 = vsel %vm932, %v852, 0.0
        %v941 = vsel %vm933, %v853, 0.0
        %v942 = vsel %vm934, %v854, 0.0
        %v943 = vsel %vm935, %v855, 0.0
        %v944 = vsel %vm936, %v856, 0.0
        %v945 = vsel %vm937, %v857, 0.0
        %v946 = vsel %vm938, %v858, 0.0
        %v947 = vsel %vm939, %v859, 0.0
        %v948 = vadd.f32 %v940, %v941
        %v949 = vadd.f32 %v948, %v942
        %v950 = vadd.f32 %v949, %v943
        %v951 = vadd.f32 %v950, %v944
        %v952 = vadd.f32 %v951, %v945
        %v953 = vadd.f32 %v952, %v946
        %v954 = vadd.f32 %v953, %v947
        %955 = vadd.xlane.f32.xlu0 %v954
        %v956 = vpop.xlane.xlu0 %955
        %v957 = vrot.slane %v956, 4
        %v958 = vadd.f32 %v956, %v957
        %v959 = vrot.slane %v958, 2
        %v960 = vadd.f32 %v958, %v959
        %v961 = vrot.slane %v960, 1
        %v962 = vadd.f32 %v960, %v961
        %s963 = vtos %v962
        %v964 = vstv %s963
        %v965 = vadd.f32 %v931, %v964
        %vm966 = vcmask 0
        %967 = vst.msk [vmem:[#allocation4] sm:$0x1] %vm966, %v965
        %v968 = vld [vmem:[#allocation6] sm:$0x1]
        %v969 = vsel %vm895, 0.0, %v852
        %v970 = vsel %vm896, 0.0, %v853
        %v971 = vsel %vm897, 0.0, %v854
        %v972 = vsel %vm898, 0.0, %v855
        %v973 = vsel %vm899, 0.0, %v856
        %v974 = vsel %vm900, 0.0, %v857
        %v975 = vsel %vm901, 0.0, %v858
        %v976 = vsel %vm902, 0.0, %v859
        %v977 = vadd.f32 %v969, %v970
        %v978 = vadd.f32 %v977, %v971
        %v979 = vadd.f32 %v978, %v972
        %v980 = vadd.f32 %v979, %v973
        %v981 = vadd.f32 %v980, %v974
        %v982 = vadd.f32 %v981, %v975
        %v983 = vadd.f32 %v982, %v976
        %984 = vadd.xlane.f32.xlu0 %v983
        %v985 = vpop.xlane.xlu0 %984
        %v986 = vrot.slane %v985, 4
        %v987 = vadd.f32 %v985, %v986
        %v988 = vrot.slane %v987, 2
        %v989 = vadd.f32 %v987, %v988
        %v990 = vrot.slane %v989, 1
        %v991 = vadd.f32 %v989, %v990
        %s992 = vtos %v991
        %v993 = vstv %s992
        %v994 = vadd.f32 %v968, %v993
        %995 = vst.msk [vmem:[#allocation6] sm:$0x1] %vm966, %v994
        %v996 = vsel %vm895, 1.0, 0.0
        %v997 = vsel %vm896, 1.0, 0.0
        %v998 = vsel %vm897, 1.0, 0.0
        %v999 = vsel %vm898, 1.0, 0.0
        %v1000 = vsel %vm899, 1.0, 0.0
        %v1001 = vsel %vm900, 1.0, 0.0
        %v1002 = vsel %vm901, 1.0, 0.0
        %v1003 = vsel %vm902, 1.0, 0.0
        %v1004 = vadd.f32 %v996, %v997
        %v1005 = vadd.f32 %v1004, %v998
        %v1006 = vadd.f32 %v1005, %v999
        %v1007 = vadd.f32 %v1006, %v1000
        %v1008 = vadd.f32 %v1007, %v1001
        %v1009 = vadd.f32 %v1008, %v1002
        %v1010 = vadd.f32 %v1009, %v1003
        %1011 = vadd.xlane.f32.xlu0 %v1010
        %v1012 = vpop.xlane.xlu0 %1011
        %v1013 = vrot.slane %v1012, 4
        %v1014 = vadd.f32 %v1012, %v1013
        %v1015 = vrot.slane %v1014, 2
        %v1016 = vadd.f32 %v1014, %v1015
        %v1017 = vrot.slane %v1016, 1
        %v1018 = vadd.f32 %v1016, %v1017
        %s1019 = vtos %v1018
        %v1020 = vstv %s1019
        %v1021 = vld [vmem:[#allocation5] sm:$0x1]
        %v1022 = vsub.f32 %v1020, 64.0
        %v1023 = vadd.f32 %v1021, %v1022
        %1024 = vst.msk [vmem:[#allocation5] sm:$0x1] %vm966, %v1023
        %v1025 = vld [vmem:[#allocation7] sm:$0x1]
        %v1026 = vsub.f32 8192.0, %v1020
        %v1027 = vadd.f32 %v1025, %v1026
        %1028 = vst.msk [vmem:[#allocation7] sm:$0x1] %vm966, %v1027
        %p1029 = scmp.eq.s32.totalorder %s15, 1
        // Predicated region
        $region37: #{tpu_custom_call.1} parent=31 // pred_check
          %p1030 = pneg %p1029
        $region38: #{tpu_custom_call.1} parent=31 // pred_check_branch
          %1032 = sbr.rel (%p1030) target = $region40
        $region39: #{tpu_custom_call.1} parent=31 // pred_region
          %v1033 = vld [vmem:[#allocation4] sm:$0x1]
          %v1034 = vld [vmem:[#allocation5] sm:$0x1]
          %v1035 = vadd.f32 %v1034, 1e-06
          %v1036 = vrcp.pop %v1035
          %v1037 = vmul.f32 %v1035, %v1036
          %v1038 = vsub.f32 1.0, %v1037
          %v1039 = vmul.f32 %v1036, %v1038
          %v1040 = vadd.f32 %v1036, %v1039
          %vm1041 = vweird.f32 %v1035
          %vm1042 = vweird.f32 %v1036
          %vm1043 = vmor %vm1041, %vm1042
          %v1044 = vsel %vm1043, %v1036, %v1040
          %v1045 = vand.u32 2147483647, %v1035
          %vm1046 = vcmp.eq.f32.partialorder %v1045, 8.507059e+37
          %v1047 = vand.u32 %v1035, 2147483648
          %v1048 = vor.u32 1.1754944e-38, %v1047
          %v1049 = vsel %vm1046, %v1048, %v1044
          %v1050 = vmul.f32 %v1033, %v1049
          %v1051 = vld [vmem:[#allocation6] sm:$0x1]
          %v1052 = vld [vmem:[#allocation7] sm:$0x1]
          %v1053 = vadd.f32 %v1052, 1e-06
          %v1054 = vrcp.pop %v1053
          %v1055 = vmul.f32 %v1053, %v1054
          %v1056 = vsub.f32 1.0, %v1055
          %v1057 = vmul.f32 %v1054, %v1056
          %v1058 = vadd.f32 %v1054, %v1057
          %vm1059 = vweird.f32 %v1053
          %vm1060 = vweird.f32 %v1054
          %vm1061 = vmor %vm1059, %vm1060
          %v1062 = vsel %vm1061, %v1054, %v1058
          %v1063 = vand.u32 2147483647, %v1053
          %vm1064 = vcmp.eq.f32.partialorder %v1063, 8.507059e+37
          %v1065 = vand.u32 %v1053, 2147483648
          %v1066 = vor.u32 1.1754944e-38, %v1065
          %v1067 = vsel %vm1064, %v1066, %v1062
          %v1068 = vmul.f32 %v1051, %v1067
          %v1069 = vsub.f32 1.0, %v1050
          %v1070 = vmul.f32 %v1068, 0.5
          %v1071 = vadd.f32 %v1069, %v1070
          %1072 = vst.msk [vmem:[#allocation8] sm:$0x1] %vm966, %v1071
        $region40: #{tpu_custom_call.1} parent=31 // pred_fallthru
          _
        // Predicated region
        $region41: #{tpu_custom_call.1} parent=31 // pred_check
          %p1073 = pneg %p91
        $region42: #{tpu_custom_call.1} parent=31 // pred_check_branch
          %1075 = sbr.rel (%p1073) target = $region44
        $region43: #{tpu_custom_call.1} parent=31 // pred_region
          %1077 = vsyncadd [#allocation9], 0
          %s1079 = sshll.u32 [#allocation8], 4
          %s1080 = int_to_ptr.vmem [resolvable:$true] %s1079
          %s1081 = sshll.u32 %s3, 4
          %s1082 = int_to_ptr.hbm [resolvable:$true] %s1081
          %1084 = dma.vmem_to_hbm [thread:$0]  %s1080, 16, %s1082, [#allocation9]
        $region44: #{tpu_custom_call.1} parent=31 // pred_fallthru
          _
        // Predicated region
        $region45: #{tpu_custom_call.1} parent=31 // pred_check
          %p1085 = pneg %p91
        $region46: #{tpu_custom_call.1} parent=31 // pred_check_branch
          %1087 = sbr.rel (%p1085) target = $region48
        $region47: #{tpu_custom_call.1} parent=31 // pred_region
          %1089 = dma.done [#allocation9], 16
        $region48: #{tpu_custom_call.1} parent=31 // pred_fallthru
          _
      $region32: #{tpu_custom_call.1} parent=5 // pred_fallthru
        _
      %p1090 = scmp.le.s32.totalorder 2, %s10
      // Predicated region
      $region49: #{tpu_custom_call.1} parent=5 // pred_check
        %p1091 = pneg %p1090
      $region50: #{tpu_custom_call.1} parent=5 // pred_check_branch
        %1093 = sbr.rel (%p1091) target = $region52
      $region51: #{tpu_custom_call.1} parent=5 // pred_region
        %s1094 = ssub.s32 %s10, 2
      $region52: #{tpu_custom_call.1} parent=5 // pred_fallthru
        _
    $region6: #{tpu_custom_call.1} parent=1 // loop_footer
      %s14 = sadd.s32 1, %s10
    $region7: #{tpu_custom_call.1} parent=1 // loop_footer_branch
      %9 = sbr.rel target = $region3
    $region8: #{tpu_custom_call.1} parent=1 // loop_exit
      _
    %1095 = vsyncpa [#allocation9], 1
    %s1096 = scalar_lea.sflag [#allocation9], 1
    %1097 = vsyncpa %s1096, 1

</llo_original>
